<compile_context>
chip_gen: v6e
topology: v6e:2x2x1
jax: 0.10.0
libtpu: 0.0.40
codegen_flags: <defaults>
</compile_context>

<pallas_src>
import functools

import jax
import jax.numpy as jnp
from jax import lax
from jax.experimental import pallas as pl
from jax.experimental.pallas import tpu as pltpu

_LANES = 128
_SUBLANES = 8
_CHUNK_ROWS = 256               # in-kernel sub-slab; bounds live intermediates
_TARGET_BLOCK_BYTES = 8 << 20   # ~8 MiB per input block


def _round_up(x, m):
    return (x + m - 1) // m * m


@functools.lru_cache(maxsize=1)
def _num_core_splits():
    # v7x has 2 TensorCores per chip; v5e/v6e have 1. Default to 1 (always
    # correct, just single-core) if detection fails.
    try:
        kind = jax.devices()[0].device_kind.lower()
    except Exception:
        return 1
    return 2 if "v7" in kind else 1


def _mse_sum_kernel(t_ref, p_ref, out_ref, acc_ref, *, rows, block_rows,
                    chunk_rows, inner_tiles, maybe_ragged, emit_scalar):
    c = pl.program_id(0)   # core-split ("parallel") axis
    j = pl.program_id(1)   # reduction ("arbitrary") axis
    num_chunks = block_rows // chunk_rows

    # acc_ref is a per-core VMEM scratch accumulator, resident across the j loop.
    @pl.when(j == 0)
    def _():
        acc_ref[...] = jnp.zeros_like(acc_ref)

    tile_idx = c * inner_tiles + j
    # May be <= 0 for a clamped duplicate tile, or < block_rows for the ragged
    # last tile; >= block_rows for full tiles.
    valid_rows = rows - tile_idx * block_rows

    def chunk_sum(start_row, t, p, masked):
        d = p.astype(jnp.float32) - t.astype(jnp.float32)
        sq = d * d
        if masked:
            row_ids = start_row + lax.broadcasted_iota(jnp.int32, sq.shape, 0)
            sq = jnp.where(row_ids < valid_rows, sq, 0.0)
        # Fold onto (8, 128) with pure VPU vector adds (no cross-lane reduce).
        return sq.reshape(-1, _SUBLANES, _LANES).sum(axis=0)

    def accumulate(masked):
        if num_chunks == 1:
            acc_ref[...] += chunk_sum(0, t_ref[...], p_ref[...], masked)
        else:
            def body(i, carry):
                start = pl.multiple_of(i * chunk_rows, chunk_rows)
                return carry + chunk_sum(
                    start,
                    t_ref[pl.ds(start, chunk_rows), :],
                    p_ref[pl.ds(start, chunk_rows), :],
                    masked)
            acc_ref[...] += lax.fori_loop(
                0, num_chunks, body,
                jnp.zeros((_SUBLANES, _LANES), jnp.float32))

    if maybe_ragged:
        # Only the ragged/duplicated tiles pay the iota+cmp+select cost.
        @pl.when(valid_rows >= block_rows)
        def _():
            accumulate(masked=False)

        @pl.when(valid_rows < block_rows)
        def _():
            accumulate(masked=True)
    else:
        accumulate(masked=False)

    @pl.when(j == pl.num_programs(1) - 1)
    def _():
        if emit_scalar:
            # Cross-lane/sublane reduce (XLU) once at finalize -> scalar out.
            out_ref[...] = jnp.sum(acc_ref[...], keepdims=True)
        else:
            out_ref[...] = acc_ref[...]


def mse_loss_sum(truth, predict):
    """Equivalent of nn.MSELoss(reduction='sum')(predict, truth)."""
    assert truth.shape == predict.shape, "truth/predict must have the same shape"

    t = truth.reshape(-1)
    p = predict.reshape(-1)
    n = t.shape[0]
    if n == 0:
        return jnp.zeros((), jnp.float32)

    # Pad only the flat tail to a lane multiple (128), and only when ragged.
    # Zero padding is exact for a sum of squared differences ((0-0)^2 = 0).
    rem = n % _LANES
    if rem:
        t = jnp.pad(t, (0, _LANES - rem))
        p = jnp.pad(p, (0, _LANES - rem))
    rows = t.shape[0] // _LANES
    t2 = t.reshape(rows, _LANES)
    p2 = p.reshape(rows, _LANES)

    t_item = jnp.dtype(t2.dtype).itemsize
    p_item = jnp.dtype(p2.dtype).itemsize
    itemsize = max(t_item, p_item)

    # Block sizing: multiple of the chunk (and of 8 sublanes); ~8 MiB/input.
    rows8 = _round_up(rows, _SUBLANES)
    if rows8 <= _CHUNK_ROWS:
        block_rows = rows8
        chunk_rows = block_rows
    else:
        chunk_rows = _CHUNK_ROWS
        max_block_rows = max(
            chunk_rows,
            (_TARGET_BLOCK_BYTES // (_LANES * itemsize)) // chunk_rows * chunk_rows)
        block_rows = min(max_block_rows, _round_up(rows8, chunk_rows))

    num_tiles = int(pl.cdiv(rows, block_rows))
    splits = _num_core_splits() if num_tiles >= 2 else 1
    inner_tiles = int(pl.cdiv(num_tiles, splits))
    padded_tiles = splits * inner_tiles
    maybe_ragged = (rows % block_rows != 0) or (padded_tiles != num_tiles)
    emit_scalar = (splits == 1)

    if padded_tiles == num_tiles:
        def in_index_map(c, j):
            return (c * inner_tiles + j, 0)
    else:
        def in_index_map(c, j):
            # Clamp so the second split never DMAs out of bounds; the
            # duplicated tile is fully masked (valid_rows <= 0) in-kernel.
            return (jnp.minimum(c * inner_tiles + j, num_tiles - 1), 0)

    if emit_scalar:
        out_shape = jax.ShapeDtypeStruct((1, 1), jnp.float32)
        out_spec = pl.BlockSpec((1, 1), lambda c, j: (0, 0))
        out_bytes = 4
    else:
        out_shape = jax.ShapeDtypeStruct((splits * _SUBLANES, _LANES), jnp.float32)
        out_spec = pl.BlockSpec((_SUBLANES, _LANES), lambda c, j: (c, 0))
        out_bytes = splits * _SUBLANES * _LANES * 4

    # 2 inputs x double buffer + headroom (scratch/output are tiny).
    block_bytes = block_rows * _LANES * (t_item + p_item)
    vmem_limit = max(16 << 20, 2 * block_bytes + (8 << 20))

    kernel = functools.partial(
        _mse_sum_kernel,
        rows=rows,
        block_rows=block_rows,
        chunk_rows=chunk_rows,
        inner_tiles=inner_tiles,
        maybe_ragged=maybe_ragged,
        emit_scalar=emit_scalar,
    )

    out = pl.pallas_call(
        kernel,
        out_shape=out_shape,
        grid_spec=pltpu.PrefetchScalarGridSpec(
            num_scalar_prefetch=0,
            grid=(splits, inner_tiles),
            in_specs=[
                pl.BlockSpec((block_rows, _LANES), in_index_map),
                pl.BlockSpec((block_rows, _LANES), in_index_map),
            ],
            out_specs=out_spec,
            scratch_shapes=[pltpu.VMEM((_SUBLANES, _LANES), jnp.float32)],
        ),
        compiler_params=pltpu.CompilerParams(
            dimension_semantics=("parallel", "arbitrary"),
            vmem_limit_bytes=int(vmem_limit),
        ),
        cost_estimate=pl.CostEstimate(
            flops=3 * n,
            transcendentals=0,
            bytes_accessed=n * (t_item + p_item) + out_bytes,
        ),
    )(t2, p2)

    if emit_scalar:
        return out.reshape(())
    # v7x dual-core path: tiny (16, 128) partial slab -> scalar in XLA.
    return jnp.sum(out)


if __name__ == "__main__":
    key = jax.random.PRNGKey(0)
    k1, k2 = jax.random.split(key)

    batch_size, predict_dim = 2, 32
    truth = jax.random.normal(k1, (batch_size, predict_dim), dtype=jnp.float32)
    predict = jax.random.normal(k2, (batch_size, predict_dim), dtype=jnp.float32)

    loss_fn = jax.jit(mse_loss_sum)
    loss = jax.block_until_ready(loss_fn(truth, predict))

    # Reference check (same semantics as torch nn.MSELoss(reduction='sum')).
    ref = jnp.sum((predict - truth) ** 2)
    assert jnp.allclose(loss, ref, rtol=1e-5, atol=1e-5), (loss, ref)

    print("KERNEL_OK")
</pallas_src>

<mosaic_0001>
module attributes {stable_mosaic.version = 11 : i64} {
  func.func @_mse_sum_kernel(%arg0: i32, %arg1: i32, %arg2: memref<8x128xf32, #tpu.memory_space<vmem>>, %arg3: memref<8x128xf32, #tpu.memory_space<vmem>>, %arg4: memref<1x1xf32, #tpu.memory_space<vmem>>, %arg5: memref<8x128xf32, #tpu.memory_space<vmem>>) attributes {dimension_semantics = [#tpu.dimension_semantics<parallel>, #tpu.dimension_semantics<arbitrary>], iteration_bounds = array<i64: 1, 1>, scalar_prefetch = 0 : i64, scratch_operands = 1 : i64, tpu.core_type = #tpu.core_type<tc>, window_params = [{transform_indices = @transform_0, window_bounds = array<i64: 8, 128>}, {transform_indices = @transform_1, window_bounds = array<i64: 8, 128>}, {pipeline_mode = #tpu.pipeline_mode<synchronous>, transform_indices = @transform_2, window_bounds = array<i64: 1, 1>}]} {
    %c0_i32 = arith.constant 0 : i32
    %0 = arith.cmpi eq, %arg1, %c0_i32 : i32
    %1 = arith.extui %0 : i1 to i32
    %c0_i32_0 = arith.constant 0 : i32
    %2 = arith.cmpi ne, %1, %c0_i32_0 : i32
    scf.if %2 {
      %cst = arith.constant 0.000000e+00 : f32
      %16 = vector.broadcast %cst : f32 to vector<8x128xf32>
      %c0 = arith.constant 0 : index
      %c0_8 = arith.constant 0 : index
      %17 = vector.load %arg5[%c0, %c0_8] : memref<8x128xf32, #tpu.memory_space<vmem>>, vector<8x128xf32>
      tpu.vector_store %arg5[%c0, %c0_8], %16 {strides = array<i32>} : memref<8x128xf32, #tpu.memory_space<vmem>>, vector<8x128xf32>,
    } else {
    }
    %c1_i32 = arith.constant 1 : i32
    %3 = arith.muli %arg0, %c1_i32 : i32
    %4 = arith.addi %3, %arg1 : i32
    %c8_i32 = arith.constant 8 : i32
    %5 = arith.muli %4, %c8_i32 : i32
    %c1_i32_1 = arith.constant 1 : i32
    %6 = arith.subi %c1_i32_1, %5 : i32
    %c8_i32_2 = arith.constant 8 : i32
    %7 = arith.cmpi sge, %6, %c8_i32_2 : i32
    %8 = arith.extui %7 : i1 to i32
    %c0_i32_3 = arith.constant 0 : i32
    %9 = arith.cmpi ne, %8, %c0_i32_3 : i32
    scf.if %9 {
      %c0 = arith.constant 0 : index
      %c0_8 = arith.constant 0 : index
      %16 = vector.load %arg5[%c0, %c0_8] : memref<8x128xf32, #tpu.memory_space<vmem>>, vector<8x128xf32>
      %c0_9 = arith.constant 0 : index
      %c0_10 = arith.constant 0 : index
      %17 = vector.load %arg2[%c0_9, %c0_10] : memref<8x128xf32, #tpu.memory_space<vmem>>, vector<8x128xf32>
      %c0_11 = arith.constant 0 : index
      %c0_12 = arith.constant 0 : index
      %18 = vector.load %arg3[%c0_11, %c0_12] : memref<8x128xf32, #tpu.memory_space<vmem>>, vector<8x128xf32>
      %19 = arith.subf %18, %17 : vector<8x128xf32>
      %20 = arith.mulf %19, %19 : vector<8x128xf32>
      %21 = vector.shape_cast %20 : vector<8x128xf32> to vector<1x8x128xf32>
      %cst = arith.constant dense<0.000000e+00> : vector<8x128xf32>
      %22 = vector.multi_reduction <add>, %21, %cst [0] : vector<1x8x128xf32> to vector<8x128xf32>
      %23 = arith.addf %16, %22 : vector<8x128xf32>
      %c0_13 = arith.constant 0 : index
      %c0_14 = arith.constant 0 : index
      %24 = vector.load %arg5[%c0_13, %c0_14] : memref<8x128xf32, #tpu.memory_space<vmem>>, vector<8x128xf32>
      tpu.vector_store %arg5[%c0_13, %c0_14], %23 {strides = array<i32>} : memref<8x128xf32, #tpu.memory_space<vmem>>, vector<8x128xf32>,
    } else {
    }
    %c8_i32_4 = arith.constant 8 : i32
    %10 = arith.cmpi slt, %6, %c8_i32_4 : i32
    %11 = arith.extui %10 : i1 to i32
    %c0_i32_5 = arith.constant 0 : i32
    %12 = arith.cmpi ne, %11, %c0_i32_5 : i32
    scf.if %12 {
      %c0 = arith.constant 0 : index
      %c0_8 = arith.constant 0 : index
      %16 = vector.load %arg5[%c0, %c0_8] : memref<8x128xf32, #tpu.memory_space<vmem>>, vector<8x128xf32>
      %c0_9 = arith.constant 0 : index
      %c0_10 = arith.constant 0 : index
      %17 = vector.load %arg2[%c0_9, %c0_10] : memref<8x128xf32, #tpu.memory_space<vmem>>, vector<8x128xf32>
      %c0_11 = arith.constant 0 : index
      %c0_12 = arith.constant 0 : index
      %18 = vector.load %arg3[%c0_11, %c0_12] : memref<8x128xf32, #tpu.memory_space<vmem>>, vector<8x128xf32>
      %19 = arith.subf %18, %17 : vector<8x128xf32>
      %20 = arith.mulf %19, %19 : vector<8x128xf32>
      %21 = tpu.iota {dimensions = array<i32: 0>} : vector<8x128xi32>
      %c0_i32_13 = arith.constant 0 : i32
      %22 = vector.broadcast %c0_i32_13 : i32 to vector<8x128xi32>
      %23 = arith.addi %22, %21 : vector<8x128xi32>
      %24 = vector.broadcast %6 : i32 to vector<8x128xi32>
      %25 = arith.cmpi slt, %23, %24 : vector<8x128xi32>
      %cst = arith.constant 0.000000e+00 : f32
      %26 = vector.broadcast %cst : f32 to vector<8x128xf32>
      %27 = arith.select %25, %20, %26 : vector<8x128xi1>, vector<8x128xf32>
      %28 = vector.shape_cast %27 : vector<8x128xf32> to vector<1x8x128xf32>
      %cst_14 = arith.constant dense<0.000000e+00> : vector<8x128xf32>
      %29 = vector.multi_reduction <add>, %28, %cst_14 [0] : vector<1x8x128xf32> to vector<8x128xf32>
      %30 = arith.addf %16, %29 : vector<8x128xf32>
      %c0_15 = arith.constant 0 : index
      %c0_16 = arith.constant 0 : index
      %31 = vector.load %arg5[%c0_15, %c0_16] : memref<8x128xf32, #tpu.memory_space<vmem>>, vector<8x128xf32>
      tpu.vector_store %arg5[%c0_15, %c0_16], %30 {strides = array<i32>} : memref<8x128xf32, #tpu.memory_space<vmem>>, vector<8x128xf32>,
    } else {
    }
    %c0_i32_6 = arith.constant 0 : i32
    %13 = arith.cmpi eq, %arg1, %c0_i32_6 : i32
    %14 = arith.extui %13 : i1 to i32
    %c0_i32_7 = arith.constant 0 : i32
    %15 = arith.cmpi ne, %14, %c0_i32_7 : i32
    scf.if %15 {
      %c0 = arith.constant 0 : index
      %c0_8 = arith.constant 0 : index
      %16 = vector.load %arg5[%c0, %c0_8] : memref<8x128xf32, #tpu.memory_space<vmem>>, vector<8x128xf32>
      %17 = vector.shape_cast %16 : vector<8x128xf32> to vector<1x8x128xf32>
      %cst = arith.constant dense<0.000000e+00> : vector<1xf32>
      %18 = vector.multi_reduction <add>, %17, %cst [1, 2] : vector<1x8x128xf32> to vector<1xf32>
      %19 = vector.shape_cast %18 : vector<1xf32> to vector<1x1x1xf32>
      %20 = vector.extract %19[0, 0, 0] : f32 from vector<1x1x1xf32>
      %21 = vector.broadcast %20 : f32 to vector<1x1xf32>
      %c0_9 = arith.constant 0 : index
      %c0_10 = arith.constant 0 : index
      %22 = vector.load %arg4[%c0_9, %c0_10] : memref<1x1xf32, #tpu.memory_space<vmem>>, vector<1x1xf32>
      tpu.vector_store %arg4[%c0_9, %c0_10], %21 {strides = array<i32>} : memref<1x1xf32, #tpu.memory_space<vmem>>, vector<1x1xf32>,
    } else {
    }
    return
  }
  func.func @transform_0(%arg0: i32, %arg1: i32) -> (i32, i32) {
    %c1_i32 = arith.constant 1 : i32
    %0 = arith.muli %arg0, %c1_i32 : i32
    %1 = arith.addi %0, %arg1 : i32
    %c0_i32 = arith.constant 0 : i32
    %c0_i32_0 = arith.constant 0 : i32
    return %1, %c0_i32 : i32, i32
  }
  func.func @transform_1(%arg0: i32, %arg1: i32) -> (i32, i32) {
    %c1_i32 = arith.constant 1 : i32
    %0 = arith.muli %arg0, %c1_i32 : i32
    %1 = arith.addi %0, %arg1 : i32
    %c0_i32 = arith.constant 0 : i32
    %c0_i32_0 = arith.constant 0 : i32
    return %1, %c0_i32 : i32, i32
  }
  func.func @transform_2(%arg0: i32, %arg1: i32) -> (i32, i32) {
    %c0_i32 = arith.constant 0 : i32
    %c0_i32_0 = arith.constant 0 : i32
    %c0_i32_1 = arith.constant 0 : i32
    return %c0_i32, %c0_i32_0 : i32, i32
  }
}

</mosaic_0001>

<llo_original>
// kernel: mse_loss_sum.1
$region0: #{mse_loss_sum.1}
  #allocation0 [shape = 'u32[]', space=smem, size = 0x4, offset = 0x4, fixed_abs, tag = 'smem constant byte address 0x4 - core index']
  #allocation1 [shape = 'u32[144,128]{1,0:T(1,128)}', space=vmem, size = 0x12000, scoped, tag = 'internal scratch']
  #allocation2 [shape = 'f32[8,128]{1,0:T(8,128)}', space=vmem, size = 0x1000, scoped, tag = 'scratch operand']
  %s0 = inlined_call_operand.vmem [shape: f32[1,128], index: 0, kind: input, shape index: {}]
  %s1 = inlined_call_operand.vmem [shape: f32[1,128], index: 1, kind: input, shape index: {}]
  %s2 = inlined_call_operand.hbm [shape: f32[1,1], index: 2, kind: output, shape index: {}]
  %s3 = sld [smem:[#allocation0]]
  $region34: #{mse_loss_sum.1} parent=0
    _
  %s5 = ssub.s32 1, %s3
  %s6 = scalar_select 0, %s5, %s3
  $region1: #{mse_loss_sum.1} parent=0
    #allocation3 [shape = 'u8[512]{0}', space=vmem, size = 0x400, scoped, tag = 'output window, operand 0, single buffered']
    #allocation4 [shape = 's32[1]{0}', space=sflag, size = 0x4, scoped, tag = 'scoped memory for mse_loss_sum.1']
    %7 = vsyncpa [#allocation4], 0
    // Predicated region
    $region2: #{mse_loss_sum.1} parent=1 // pred_check
      _
    $region3: #{mse_loss_sum.1} parent=1 // pred_check_branch
      %9 = sbr.rel (0) target = $region5
    $region4: #{mse_loss_sum.1} parent=1 // pred_region
      %s10 = sadd.s32 0, 0
      %s11 = smul.u32 8, %s10
      %s12 = ssub.s32 1, %s11
      %s13 = smul.u32 16, %s12
      %p14 = scmp.lt.s32.totalorder %s11, 0
      %s15 = scalar_select %p14, %s11, 0
      %s16 = scalar_lea.vmem %s0, %s15
      %s17 = sadd.s32 0, 0
      %s18 = smul.u32 8, %s17
      %s19 = ssub.s32 1, %s18
      %s20 = smul.u32 16, %s19
    $region5: #{mse_loss_sum.1} parent=1 // pred_fallthru
      _
    // Predicated region
    $region6: #{mse_loss_sum.1} parent=1 // pred_check
      _
    $region7: #{mse_loss_sum.1} parent=1 // pred_check_branch
      %22 = sbr.rel (0) target = $region9
    $region8: #{mse_loss_sum.1} parent=1 // pred_region
      %s23 = sadd.s32 0, 0
      %s24 = smul.u32 8, %s23
      %s25 = ssub.s32 1, %s24
      %s26 = smul.u32 16, %s25
      %p27 = scmp.lt.s32.totalorder %s24, 0
      %s28 = scalar_select %p27, %s24, 0
      %s29 = scalar_lea.vmem %s1, %s28
      %s30 = sadd.s32 0, 0
      %s31 = smul.u32 8, %s30
      %s32 = ssub.s32 1, %s31
      %s33 = smul.u32 16, %s32
    $region9: #{mse_loss_sum.1} parent=1 // pred_fallthru
      _
    %s34 = sadd.s32 0, 0
    %s35 = smul.u32 8, %s34
    %s36 = ssub.s32 1, %s35
    %s37 = smul.u32 16, %s36
    %p38 = scmp.lt.s32.totalorder %s35, 0
    %s39 = scalar_select %p38, %s35, 0
    %s40 = scalar_lea.vmem %s0, %s39
    %s41 = sadd.s32 0, 0
    %s42 = smul.u32 8, %s41
    %s43 = ssub.s32 1, %s42
    %s44 = smul.u32 16, %s43
    %p45 = scmp.lt.s32.totalorder %s42, 0
    %s46 = scalar_select %p45, %s42, 0
    %s47 = scalar_lea.vmem %s1, %s46
    %s48 = sadd.s32 0, 0
    %s49 = smul.u32 8, %s48
    %s50 = ssub.s32 1, %s49
    %s51 = smul.u32 16, %s50
    %p52 = scmp.lt.s32.totalorder %s49, 0
    %s53 = scalar_select %p52, %s49, 0
    %s54 = scalar_lea.vmem %s0, %s53
    %s55 = sadd.s32 0, 0
    %s56 = smul.u32 8, %s55
    %s57 = ssub.s32 1, %s56
    %s58 = smul.u32 16, %s57
    %s59 = sadd.s32 0, 0
    %s60 = smul.u32 8, %s59
    %s61 = ssub.s32 1, %s60
    %s62 = smul.u32 16, %s61
    %p63 = scmp.lt.s32.totalorder %s60, 0
    %s64 = scalar_select %p63, %s60, 0
    %s65 = scalar_lea.vmem %s1, %s64
    %s66 = sadd.s32 0, 0
    %s67 = smul.u32 8, %s66
    %s68 = ssub.s32 1, %s67
    %s69 = smul.u32 16, %s68
    %p70 = scmp.eq.s32.totalorder 0, 0
    // Predicated region
    $region10: #{mse_loss_sum.1} parent=1 // pred_check
      %p71 = pneg %p70
    $region11: #{mse_loss_sum.1} parent=1 // pred_check_branch
      %73 = sbr.rel (%p71) target = $region13
    $region12: #{mse_loss_sum.1} parent=1 // pred_region
      %74 = vst [vmem:[#allocation2] sm:$0xff] 0.0
    $region13: #{mse_loss_sum.1} parent=1 // pred_fallthru
      _
    %s75 = sadd.s32 0, 0
    %s76 = smul.u32 %s75, 8
    %s77 = ssub.s32 1, %s76
    %p78 = scmp.ge.s32.totalorder %s77, 8
    // Predicated region
    $region14: #{mse_loss_sum.1} parent=1 // pred_check
      %p79 = pneg %p78
    $region15: #{mse_loss_sum.1} parent=1 // pred_check_branch
      %81 = sbr.rel (%p79) target = $region17
    $region16: #{mse_loss_sum.1} parent=1 // pred_region
      %v82 = vld [vmem:[#allocation2] sm:$0xff]
      %v83 = vld [vmem:[%s54] sm:$0xff]
      %v84 = vld [vmem:[%s65] sm:$0xff]
      %v85 = vsub.f32 %v84, %v83
      %v86 = vmul.f32 %v85, %v85
      %v87 = vadd.f32 %v86, 0.0
      %v88 = vadd.f32 %v82, %v87
      %89 = vst [vmem:[#allocation2] sm:$0xff] %v88
    $region17: #{mse_loss_sum.1} parent=1 // pred_fallthru
      _
    %p90 = scmp.lt.s32.totalorder %s77, 8
    // Predicated region
    $region18: #{mse_loss_sum.1} parent=1 // pred_check
      %p91 = pneg %p90
    $region19: #{mse_loss_sum.1} parent=1 // pred_check_branch
      %93 = sbr.rel (%p91) target = $region21
    $region20: #{mse_loss_sum.1} parent=1 // pred_region
      %v94 = vld [vmem:[#allocation2] sm:$0xff]
      %v95 = vld [vmem:[%s54] sm:$0xff]
      %v96 = vld [vmem:[%s65] sm:$0xff]
      %v97 = vsub.f32 %v96, %v95
      %v98 = vmul.f32 %v97, %v97
      %v99 = vlaneseq
      %v100 = vshrl.u32 %v99, 7
      %v101 = vstv %s77
      %vm102 = vcmp.lt.s32.totalorder %v100, %v101
      %v103 = vsel %vm102, %v98, 0.0
      %v104 = vadd.f32 %v103, 0.0
      %v105 = vadd.f32 %v94, %v104
      %106 = vst [vmem:[#allocation2] sm:$0xff] %v105
    $region21: #{mse_loss_sum.1} parent=1 // pred_fallthru
      _
    // Predicated region
    $region22: #{mse_loss_sum.1} parent=1 // pred_check
      %p107 = pneg %p70
    $region23: #{mse_loss_sum.1} parent=1 // pred_check_branch
      %109 = sbr.rel (%p107) target = $region25
    $region24: #{mse_loss_sum.1} parent=1 // pred_region
      %v110 = vld [vmem:[#allocation2] sm:$0xff]
      %111 = vadd.xlane.f32.xlu0 %v110
      %v112 = vpop.xlane.xlu0 %111
      %v113 = vrot.slane %v112, 4
      %v114 = vadd.f32 %v112, %v113
      %v115 = vrot.slane %v114, 2
      %v116 = vadd.f32 %v114, %v115
      %v117 = vrot.slane %v116, 1
      %v118 = vadd.f32 %v116, %v117
      %s119 = vtos %v118
      %v120 = vstv %s119
      %vm121 = vcmask 0
      %122 = vst.msk [vmem:[#allocation3] sm:$0x1] %vm121, %v120
    $region25: #{mse_loss_sum.1} parent=1 // pred_fallthru
      _
    // Predicated region
    $region26: #{mse_loss_sum.1} parent=1 // pred_check
      _
    $region27: #{mse_loss_sum.1} parent=1 // pred_check_branch
      %124 = sbr.rel (0) target = $region29
    $region28: #{mse_loss_sum.1} parent=1 // pred_region
      %s126 = ssub.s32 16, 16
      %127 = vsyncadd [#allocation4], %s126
      %s129 = sshll.u32 [#allocation3], 4
      %s130 = int_to_ptr.vmem [resolvable:$true] %s129
      %132 = dma.vmem_to_hbm [thread:$0]  %s130, 16, %s2, [#allocation4]
    $region29: #{mse_loss_sum.1} parent=1 // pred_fallthru
      _
    // Predicated region
    $region30: #{mse_loss_sum.1} parent=1 // pred_check
      _
    $region31: #{mse_loss_sum.1} parent=1 // pred_check_branch
      %134 = sbr.rel (0) target = $region33
    $region32: #{mse_loss_sum.1} parent=1 // pred_region
      %135 = dma.done [#allocation4], 16
    $region33: #{mse_loss_sum.1} parent=1 // pred_fallthru
      _
    %136 = vsyncpa [#allocation4], 1

</llo_original>
